<compile_context>
chip_gen: v5e
topology: v5e:2x2
jax: 0.10.0
libtpu: 0.0.40
codegen_flags: <defaults>
</compile_context>

<pallas_src>
import functools
import math

import jax
import jax.numpy as jnp
from jax.experimental import pallas as pl
from jax.experimental.pallas import tpu as pltpu

_LANE = 128              # lane width: last dim of every VMEM tile
_DEFAULT_TILE_M = 1024   # row tile (amortizes ~0.35 us per grid step)


def _round_up(x, m):
    return (x + m - 1) // m * m


def _cdiv(a, b):
    return (a + b - 1) // b


def _vmem_budget_bytes():
    """~75% of this device's VMEM, with a conservative (v7x per-TC) fallback."""
    try:
        cap = int(pltpu.get_tpu_info().vmem_capacity_bytes)
        return max(int(cap * 0.75), 16 << 20)
    except Exception:
        return 48 << 20


def _fused_mlp_kernel(x_ref, w_ref, b_ref, o_ref, *, num_layers, out_pad,
                      compute_dtype):
    """All Linear(+ReLU) layers fused into one kernel invocation.

    x_ref : (TILE_M, Dpad)     activation tile (compute dtype, pipelined)
    w_ref : (L, Dpad, Dpad)    zero-padded, pre-transposed weights (resident)
    b_ref : (L, 1, Dpad)       zero-padded f32 biases (resident)
    o_ref : (TILE_M, OUTpad)   output tile (compute dtype)
    """
    h = x_ref[...]                                   # already compute dtype
    for layer in range(num_layers):                  # unrolled at trace time
        # MXU matmul, f32 accumulation.
        acc = jnp.dot(h, w_ref[layer], preferred_element_type=jnp.float32)
        acc = acc + b_ref[layer]                     # f32 epilogue
        if layer < num_layers - 1:
            h = jnp.maximum(acc, 0.0).astype(compute_dtype)
        else:
            # Narrow, lane-aligned output store (out_pad is a multiple of 128).
            o_ref[...] = acc[:, :out_pad].astype(o_ref.dtype)


class PallasMLP:
    """JAX/Pallas equivalent of the PyTorch MLP (FFN) module.

    `dtype` is the streaming/compute dtype of activations and weights
    (bf16 by default; all matmuls accumulate in f32).  The returned array is
    in `dtype`; cast outside if f32 is required.
    """

    def __init__(self, input_dim, hidden_dim, output_dim, num_layers, key,
                 dtype=jnp.bfloat16):
        self.num_layers = num_layers
        self.input_dim = input_dim
        self.output_dim = output_dim
        self.dtype = jnp.dtype(dtype)

        dims_in = [input_dim] + [hidden_dim] * (num_layers - 1)
        dims_out = [hidden_dim] * (num_layers - 1) + [output_dim]
        self.d_pad = _round_up(max(dims_in + dims_out), _LANE)
        self.out_pad = _round_up(output_dim, _LANE)

        self.weights = []   # unpadded transposed f32 weights (in, out), for reference
        self.biases = []    # unpadded f32 biases (out,)
        w_stack, b_stack = [], []
        for n, k in zip(dims_in, dims_out):
            key, wk, bk = jax.random.split(key, 3)
            # mimic nn.Linear's uniform(-1/sqrt(fan_in), 1/sqrt(fan_in)) init
            bound = 1.0 / math.sqrt(n)
            w = jax.random.uniform(wk, (k, n), jnp.float32, -bound, bound)  # (out, in)
            b = jax.random.uniform(bk, (k,), jnp.float32, -bound, bound)
            w_t = jnp.transpose(w)                                          # (in, out)
            self.weights.append(w_t)
            self.biases.append(b)
            # Zero-padded copies: padded lanes stay exactly zero through every
            # matmul + bias + ReLU, so they cannot leak into real outputs.
            w_p = jnp.zeros((self.d_pad, self.d_pad), self.dtype).at[:n, :k].set(
                w_t.astype(self.dtype))
            b_p = jnp.zeros((1, self.d_pad), jnp.float32).at[0, :k].set(b)
            w_stack.append(w_p)
            b_stack.append(b_p)

        self.w_stack = jnp.stack(w_stack)   # (L, Dpad, Dpad)  compute dtype
        self.b_stack = jnp.stack(b_stack)   # (L, 1, Dpad)     f32

        # TODO(synk): when num_layers * d_pad^2 * itemsize approaches the
        # per-core VMEM budget (wide/deep MLPs on v7x), stream weights
        # layer-by-layer (memory_space=pl.ANY + pltpu.make_async_copy double
        # buffer) instead of keeping the whole stack resident.

    def _sublane(self):
        # bf16 packs 2 rows per sublane -> (16, 128) native tiles; f32 -> (8, 128)
        return 16 if self.dtype.itemsize == 2 else 8

    def _pick_tiling(self, m, tile_m_target):
        sub = self._sublane()
        n_tiles = max(_cdiv(m, max(tile_m_target, sub)), 1)
        # v7x: make sure both TensorCores get a grid step when rows allow it.
        if n_tiles == 1 and m >= 2 * sub:
            n_tiles = 2
        tile_m = _round_up(_cdiv(m, n_tiles), sub)   # minimal row padding
        m_pad = tile_m * n_tiles
        return tile_m, m_pad, n_tiles

    def _invoke(self, x_p, tile_m, n_tiles, use_buffered):
        d = self.d_pad
        out_pad = self.out_pad
        n_layers = self.num_layers
        m_pad = tile_m * n_tiles
        itemsize = self.dtype.itemsize

        kernel = functools.partial(
            _fused_mlp_kernel, num_layers=n_layers, out_pad=out_pad,
            compute_dtype=self.dtype)

        resident_kw = {}
        if use_buffered:
            # Single-buffer operands whose block index never changes.
            resident_kw = dict(pipeline_mode=pl.Buffered(1))

        w_bytes = self.w_stack.size * itemsize
        b_bytes = self.b_stack.size * 4
        io_bytes = 2 * tile_m * d * itemsize + 2 * tile_m * out_pad * itemsize
        resident_bytes = (w_bytes + b_bytes) * (1 if use_buffered else 2)
        vmem_needed = resident_bytes + io_bytes + (2 << 20)
        vmem_limit = int(min(max(vmem_needed, 8 << 20), _vmem_budget_bytes()))

        flops = 2 * m_pad * n_layers * d * d
        bytes_accessed = (m_pad * d * itemsize + w_bytes + b_bytes
                          + m_pad * out_pad * itemsize)

        return pl.pallas_call(
            kernel,
            out_shape=jax.ShapeDtypeStruct((m_pad, out_pad), self.dtype),
            grid_spec=pltpu.PrefetchScalarGridSpec(
                num_scalar_prefetch=0,
                grid=(n_tiles,),
                in_specs=[
                    pl.BlockSpec((tile_m, d), lambda i: (i, 0)),        # activations
                    pl.BlockSpec((n_layers, d, d), lambda i: (0, 0, 0),
                                 **resident_kw),                        # resident W
                    pl.BlockSpec((n_layers, 1, d), lambda i: (0, 0, 0),
                                 **resident_kw),                        # resident b
                ],
                out_specs=pl.BlockSpec((tile_m, out_pad), lambda i: (i, 0)),
            ),
            compiler_params=pltpu.CompilerParams(
                dimension_semantics=("parallel",),   # v7x: 2 TCs split the rows
                vmem_limit_bytes=vmem_limit,
            ),
            cost_estimate=pl.CostEstimate(
                flops=int(flops), transcendentals=0,
                bytes_accessed=int(bytes_accessed)),
        )(x_p, self.w_stack, self.b_stack)

    def __call__(self, x, tile_m=_DEFAULT_TILE_M):
        orig_shape = x.shape
        x2d = x.reshape(-1, orig_shape[-1])
        m = x2d.shape[0]
        d = self.d_pad

        tile_m, m_pad, n_tiles = self._pick_tiling(m, tile_m)

        # Fast path: no wrapper-side pad/cast copy when the layout already fits.
        if m_pad == m and orig_shape[-1] == d and x2d.dtype == self.dtype:
            x_p = x2d
        else:
            x_p = jnp.zeros((m_pad, d), self.dtype).at[:m, :orig_shape[-1]].set(
                x2d.astype(self.dtype))

        try:
            out_p = self._invoke(x_p, tile_m, n_tiles, use_buffered=True)
        except Exception:
            # Fallback if this jax build rejects pipeline_mode=pl.Buffered(1);
            # default double-buffering is correct, just uses a bit more VMEM.
            out_p = self._invoke(x_p, tile_m, n_tiles, use_buffered=False)

        if m_pad == m and self.out_pad == self.output_dim:
            out = out_p
        else:
            out = out_p[:m, :self.output_dim]
        return out.reshape(orig_shape[:-1] + (self.output_dim,))


if __name__ == "__main__":
    key = jax.random.PRNGKey(0)
    key, xk, pk = jax.random.split(key, 3)

    # Small shapes consistent with the module's forward: x is (..., input_dim).
    batch, seq, input_dim = 2, 8, 16
    hidden_dim, output_dim, num_layers = 32, 8, 3

    x = jax.random.normal(xk, (batch, seq, input_dim), jnp.float32)

    # ---- f32 instance: tight numerical check of the fused kernel ----
    mlp_f32 = PallasMLP(input_dim, hidden_dim, output_dim, num_layers, pk,
                        dtype=jnp.float32)
    out_f32 = jax.block_until_ready(mlp_f32(x))

    # Pure-JAX reference (unpadded weights, same layer ordering, full precision).
    ref = x.reshape(-1, input_dim)
    for i in range(num_layers):
        ref = jnp.dot(ref, mlp_f32.weights[i],
                      precision=jax.lax.Precision.HIGHEST) + mlp_f32.biases[i]
        if i < num_layers - 1:
            ref = jnp.maximum(ref, 0.0)
    ref = ref.reshape(batch, seq, output_dim)

    assert out_f32.shape == (batch, seq, output_dim)
    assert jnp.allclose(out_f32, ref, atol=1e-4, rtol=1e-4)

    # ---- bf16 instance (default streaming dtype): loose check vs f32 ref ----
    mlp_bf16 = PallasMLP(input_dim, hidden_dim, output_dim, num_layers, pk,
                         dtype=jnp.bfloat16)
    out_bf16 = jax.block_until_ready(mlp_bf16(x))
    assert out_bf16.shape == (batch, seq, output_dim)
    assert jnp.allclose(out_bf16.astype(jnp.float32), ref, atol=5e-2, rtol=5e-2)

    print("KERNEL_OK")
</pallas_src>

<mosaic_0001>
module attributes {stable_mosaic.version = 11 : i64} {
  func.func @_fused_mlp_kernel(%arg0: i32, %arg1: memref<8x128xf32, #tpu.memory_space<vmem>>, %arg2: memref<3x128x128xf32, #tpu.memory_space<vmem>>, %arg3: memref<3x1x128xf32, #tpu.memory_space<vmem>>, %arg4: memref<8x128xf32, #tpu.memory_space<vmem>>) attributes {dimension_semantics = [#tpu.dimension_semantics<parallel>], iteration_bounds = array<i64: 2>, scalar_prefetch = 0 : i64, scratch_operands = 0 : i64, tpu.core_type = #tpu.core_type<tc>, window_params = [{transform_indices = @transform_0, window_bounds = array<i64: 8, 128>}, {pipeline_mode = #tpu.pipeline_mode<synchronous>, transform_indices = @transform_1, window_bounds = array<i64: 3, 128, 128>}, {pipeline_mode = #tpu.pipeline_mode<synchronous>, transform_indices = @transform_2, window_bounds = array<i64: 3, 1, 128>}, {transform_indices = @transform_3, window_bounds = array<i64: 8, 128>}]} {
    %c0 = arith.constant 0 : index
    %c0_0 = arith.constant 0 : index
    %0 = vector.load %arg1[%c0, %c0_0] : memref<8x128xf32, #tpu.memory_space<vmem>>, vector<8x128xf32>
    %c0_1 = arith.constant 0 : index
    %c0_2 = arith.constant 0 : index
    %c0_3 = arith.constant 0 : index
    %1 = vector.load %arg2[%c0_1, %c0_2, %c0_3] : memref<3x128x128xf32, #tpu.memory_space<vmem>>, vector<1x128x128xf32>
    %2 = vector.shape_cast %1 : vector<1x128x128xf32> to vector<128x128xf32>
    %cst = arith.constant dense<0.000000e+00> : vector<8x128xf32>
    %3 = tpu.matmul %0, %2, %cst {dimension_numbers = #tpu.dot_dimension_numbers<[1], [0], [0], [1], [0, 0, 1, 1], [], []>} : vector<8x128xf32>, vector<128x128xf32>, vector<8x128xf32> -> vector<8x128xf32>
    %c0_4 = arith.constant 0 : index
    %c0_5 = arith.constant 0 : index
    %c0_6 = arith.constant 0 : index
    %4 = vector.load %arg3[%c0_4, %c0_5, %c0_6] : memref<3x1x128xf32, #tpu.memory_space<vmem>>, vector<1x1x128xf32>
    %5 = vector.shape_cast %4 : vector<1x1x128xf32> to vector<1x128xf32>
    %6 = vector.broadcast %5 : vector<1x128xf32> to vector<8x128xf32>
    %7 = arith.addf %3, %6 : vector<8x128xf32>
    %cst_7 = arith.constant 0.000000e+00 : f32
    %8 = vector.broadcast %cst_7 : f32 to vector<8x128xf32>
    %9 = arith.maximumf %7, %8 : vector<8x128xf32>
    %c1 = arith.constant 1 : index
    %c0_8 = arith.constant 0 : index
    %c0_9 = arith.constant 0 : index
    %10 = vector.load %arg2[%c1, %c0_8, %c0_9] : memref<3x128x128xf32, #tpu.memory_space<vmem>>, vector<1x128x128xf32>
    %11 = vector.shape_cast %10 : vector<1x128x128xf32> to vector<128x128xf32>
    %cst_10 = arith.constant dense<0.000000e+00> : vector<8x128xf32>
    %12 = tpu.matmul %9, %11, %cst_10 {dimension_numbers = #tpu.dot_dimension_numbers<[1], [0], [0], [1], [0, 0, 1, 1], [], []>} : vector<8x128xf32>, vector<128x128xf32>, vector<8x128xf32> -> vector<8x128xf32>
    %c1_11 = arith.constant 1 : index
    %c0_12 = arith.constant 0 : index
    %c0_13 = arith.constant 0 : index
    %13 = vector.load %arg3[%c1_11, %c0_12, %c0_13] : memref<3x1x128xf32, #tpu.memory_space<vmem>>, vector<1x1x128xf32>
    %14 = vector.shape_cast %13 : vector<1x1x128xf32> to vector<1x128xf32>
    %15 = vector.broadcast %14 : vector<1x128xf32> to vector<8x128xf32>
    %16 = arith.addf %12, %15 : vector<8x128xf32>
    %cst_14 = arith.constant 0.000000e+00 : f32
    %17 = vector.broadcast %cst_14 : f32 to vector<8x128xf32>
    %18 = arith.maximumf %16, %17 : vector<8x128xf32>
    %c2 = arith.constant 2 : index
    %c0_15 = arith.constant 0 : index
    %c0_16 = arith.constant 0 : index
    %19 = vector.load %arg2[%c2, %c0_15, %c0_16] : memref<3x128x128xf32, #tpu.memory_space<vmem>>, vector<1x128x128xf32>
    %20 = vector.shape_cast %19 : vector<1x128x128xf32> to vector<128x128xf32>
    %cst_17 = arith.constant dense<0.000000e+00> : vector<8x128xf32>
    %21 = tpu.matmul %18, %20, %cst_17 {dimension_numbers = #tpu.dot_dimension_numbers<[1], [0], [0], [1], [0, 0, 1, 1], [], []>} : vector<8x128xf32>, vector<128x128xf32>, vector<8x128xf32> -> vector<8x128xf32>
    %c2_18 = arith.constant 2 : index
    %c0_19 = arith.constant 0 : index
    %c0_20 = arith.constant 0 : index
    %22 = vector.load %arg3[%c2_18, %c0_19, %c0_20] : memref<3x1x128xf32, #tpu.memory_space<vmem>>, vector<1x1x128xf32>
    %23 = vector.shape_cast %22 : vector<1x1x128xf32> to vector<1x128xf32>
    %24 = vector.broadcast %23 : vector<1x128xf32> to vector<8x128xf32>
    %25 = arith.addf %21, %24 : vector<8x128xf32>
    %c0_21 = arith.constant 0 : index
    %c0_22 = arith.constant 0 : index
    %26 = vector.load %arg4[%c0_21, %c0_22] : memref<8x128xf32, #tpu.memory_space<vmem>>, vector<8x128xf32>
    tpu.vector_store %arg4[%c0_21, %c0_22], %25 {strides = array<i32>} : memref<8x128xf32, #tpu.memory_space<vmem>>, vector<8x128xf32>,
    return
  }
  func.func @transform_0(%arg0: i32) -> (i32, i32) {
    %c0_i32 = arith.constant 0 : i32
    %c0_i32_0 = arith.constant 0 : i32
    return %arg0, %c0_i32 : i32, i32
  }
  func.func @transform_1(%arg0: i32) -> (i32, i32, i32) {
    %c0_i32 = arith.constant 0 : i32
    %c0_i32_0 = arith.constant 0 : i32
    %c0_i32_1 = arith.constant 0 : i32
    %c0_i32_2 = arith.constant 0 : i32
    return %c0_i32, %c0_i32_0, %c0_i32_1 : i32, i32, i32
  }
  func.func @transform_2(%arg0: i32) -> (i32, i32, i32) {
    %c0_i32 = arith.constant 0 : i32
    %c0_i32_0 = arith.constant 0 : i32
    %c0_i32_1 = arith.constant 0 : i32
    %c0_i32_2 = arith.constant 0 : i32
    return %c0_i32, %c0_i32_0, %c0_i32_1 : i32, i32, i32
  }
  func.func @transform_3(%arg0: i32) -> (i32, i32) {
    %c0_i32 = arith.constant 0 : i32
    %c0_i32_0 = arith.constant 0 : i32
    return %arg0, %c0_i32 : i32, i32
  }
}

module attributes {stable_mosaic.version = 11 : i64} {
  func.func @_fused_mlp_kernel(%arg0: i32, %arg1: memref<8x128xf32, #tpu.memory_space<vmem>>, %arg2: memref<3x128x128xf32, #tpu.memory_space<vmem>>, %arg3: memref<3x1x128xf32, #tpu.memory_space<vmem>>, %arg4: memref<8x128xf32, #tpu.memory_space<vmem>>) attributes {dimension_semantics = [#tpu.dimension_semantics<parallel>], iteration_bounds = array<i64: 2>, scalar_prefetch = 0 : i64, scratch_operands = 0 : i64, tpu.core_type = #tpu.core_type<tc>, window_params = [{transform_indices = @transform_0, window_bounds = array<i64: 8, 128>}, {pipeline_mode = #tpu.pipeline_mode<synchronous>, transform_indices = @transform_1, window_bounds = array<i64: 3, 128, 128>}, {pipeline_mode = #tpu.pipeline_mode<synchronous>, transform_indices = @transform_2, window_bounds = array<i64: 3, 1, 128>}, {transform_indices = @transform_3, window_bounds = array<i64: 8, 128>}]} {
    %c0 = arith.constant 0 : index
    %c0_0 = arith.constant 0 : index
    %0 = vector.load %arg1[%c0, %c0_0] : memref<8x128xf32, #tpu.memory_space<vmem>>, vector<8x128xf32>
    %c0_1 = arith.constant 0 : index
    %c0_2 = arith.constant 0 : index
    %c0_3 = arith.constant 0 : index
    %1 = vector.load %arg2[%c0_1, %c0_2, %c0_3] : memref<3x128x128xf32, #tpu.memory_space<vmem>>, vector<1x128x128xf32>
    %2 = vector.shape_cast %1 : vector<1x128x128xf32> to vector<128x128xf32>
    %cst = arith.constant dense<0.000000e+00> : vector<8x128xf32>
    %3 = tpu.matmul %0, %2, %cst {dimension_numbers = #tpu.dot_dimension_numbers<[1], [0], [0], [1], [0, 0, 1, 1], [], []>} : vector<8x128xf32>, vector<128x128xf32>, vector<8x128xf32> -> vector<8x128xf32>
    %c0_4 = arith.constant 0 : index
    %c0_5 = arith.constant 0 : index
    %c0_6 = arith.constant 0 : index
    %4 = vector.load %arg3[%c0_4, %c0_5, %c0_6] : memref<3x1x128xf32, #tpu.memory_space<vmem>>, vector<1x1x128xf32>
    %5 = vector.shape_cast %4 : vector<1x1x128xf32> to vector<1x128xf32>
    %6 = vector.broadcast %5 : vector<1x128xf32> to vector<8x128xf32>
    %7 = arith.addf %3, %6 : vector<8x128xf32>
    %cst_7 = arith.constant 0.000000e+00 : f32
    %8 = vector.broadcast %cst_7 : f32 to vector<8x128xf32>
    %9 = arith.maximumf %7, %8 : vector<8x128xf32>
    %c1 = arith.constant 1 : index
    %c0_8 = arith.constant 0 : index
    %c0_9 = arith.constant 0 : index
    %10 = vector.load %arg2[%c1, %c0_8, %c0_9] : memref<3x128x128xf32, #tpu.memory_space<vmem>>, vector<1x128x128xf32>
    %11 = vector.shape_cast %10 : vector<1x128x128xf32> to vector<128x128xf32>
    %cst_10 = arith.constant dense<0.000000e+00> : vector<8x128xf32>
    %12 = tpu.matmul %9, %11, %cst_10 {dimension_numbers = #tpu.dot_dimension_numbers<[1], [0], [0], [1], [0, 0, 1, 1], [], []>} : vector<8x128xf32>, vector<128x128xf32>, vector<8x128xf32> -> vector<8x128xf32>
    %c1_11 = arith.constant 1 : index
    %c0_12 = arith.constant 0 : index
    %c0_13 = arith.constant 0 : index
    %13 = vector.load %arg3[%c1_11, %c0_12, %c0_13] : memref<3x1x128xf32, #tpu.memory_space<vmem>>, vector<1x1x128xf32>
    %14 = vector.shape_cast %13 : vector<1x1x128xf32> to vector<1x128xf32>
    %15 = vector.broadcast %14 : vector<1x128xf32> to vector<8x128xf32>
    %16 = arith.addf %12, %15 : vector<8x128xf32>
    %cst_14 = arith.constant 0.000000e+00 : f32
    %17 = vector.broadcast %cst_14 : f32 to vector<8x128xf32>
    %18 = arith.maximumf %16, %17 : vector<8x128xf32>
    %c2 = arith.constant 2 : index
    %c0_15 = arith.constant 0 : index
    %c0_16 = arith.constant 0 : index
    %19 = vector.load %arg2[%c2, %c0_15, %c0_16] : memref<3x128x128xf32, #tpu.memory_space<vmem>>, vector<1x128x128xf32>
    %20 = vector.shape_cast %19 : vector<1x128x128xf32> to vector<128x128xf32>
    %cst_17 = arith.constant dense<0.000000e+00> : vector<8x128xf32>
    %21 = tpu.matmul %18, %20, %cst_17 {dimension_numbers = #tpu.dot_dimension_numbers<[1], [0], [0], [1], [0, 0, 1, 1], [], []>} : vector<8x128xf32>, vector<128x128xf32>, vector<8x128xf32> -> vector<8x128xf32>
    %c2_18 = arith.constant 2 : index
    %c0_19 = arith.constant 0 : index
    %c0_20 = arith.constant 0 : index
    %22 = vector.load %arg3[%c2_18, %c0_19, %c0_20] : memref<3x1x128xf32, #tpu.memory_space<vmem>>, vector<1x1x128xf32>
    %23 = vector.shape_cast %22 : vector<1x1x128xf32> to vector<1x128xf32>
    %24 = vector.broadcast %23 : vector<1x128xf32> to vector<8x128xf32>
    %25 = arith.addf %21, %24 : vector<8x128xf32>
    %c0_21 = arith.constant 0 : index
    %c0_22 = arith.constant 0 : index
    %26 = vector.load %arg4[%c0_21, %c0_22] : memref<8x128xf32, #tpu.memory_space<vmem>>, vector<8x128xf32>
    tpu.vector_store %arg4[%c0_21, %c0_22], %25 {strides = array<i32>} : memref<8x128xf32, #tpu.memory_space<vmem>>, vector<8x128xf32>,
    return
  }
  func.func @transform_0(%arg0: i32) -> (i32, i32) {
    %c0_i32 = arith.constant 0 : i32
    %c0_i32_0 = arith.constant 0 : i32
    return %arg0, %c0_i32 : i32, i32
  }
  func.func @transform_1(%arg0: i32) -> (i32, i32, i32) {
    %c0_i32 = arith.constant 0 : i32
    %c0_i32_0 = arith.constant 0 : i32
    %c0_i32_1 = arith.constant 0 : i32
    %c0_i32_2 = arith.constant 0 : i32
    return %c0_i32, %c0_i32_0, %c0_i32_1 : i32, i32, i32
  }
  func.func @transform_2(%arg0: i32) -> (i32, i32, i32) {
    %c0_i32 = arith.constant 0 : i32
    %c0_i32_0 = arith.constant 0 : i32
    %c0_i32_1 = arith.constant 0 : i32
    %c0_i32_2 = arith.constant 0 : i32
    return %c0_i32, %c0_i32_0, %c0_i32_1 : i32, i32, i32
  }
  func.func @transform_3(%arg0: i32) -> (i32, i32) {
    %c0_i32 = arith.constant 0 : i32
    %c0_i32_0 = arith.constant 0 : i32
    return %arg0, %c0_i32 : i32, i32
  }
}

</mosaic_0001>

<llo_original>
// kernel: tpu_custom_call.1
$region0: #{tpu_custom_call.1}
  #allocation0 [shape = 'u32[]', space=smem, size = 0x4, offset = 0x4, fixed_abs, tag = 'smem constant byte address 0x4 - core index']
  #allocation1 [shape = 'u32[72,128]{1,0:T(1,128)}', space=vmem, size = 0x9000, scoped, tag = 'internal scratch']
  %s0 = inlined_call_operand.hbm [shape: f32[16,128], index: 0, kind: input, shape index: {}]
  %s1 = inlined_call_operand.hbm [shape: f32[3,128,128], index: 1, kind: input, shape index: {}]
  %s2 = inlined_call_operand.hbm [shape: f32[3,1,128], index: 2, kind: input, shape index: {}]
  %s3 = inlined_call_operand.hbm [shape: f32[16,128], index: 3, kind: output, shape index: {}]
  %s4 = sld [smem:[#allocation0]]
  $region57: #{tpu_custom_call.1} parent=0
    _
  %s6 = ssub.s32 1, %s4
  %s7 = scalar_select 0, %s6, %s4
  $region1: #{tpu_custom_call.1} parent=0
    #allocation2 [shape = 'u8[8192]{0}', space=vmem, size = 0x2000, scoped, tag = 'input window, operand 0']
    #allocation3 [shape = 's32[2]{0}', space=sflag, size = 0x8, scoped, tag = 'scoped memory for tpu_custom_call.1']
    #allocation4 [shape = 's32[2]{0}', space=sflag, size = 0x8, scoped, tag = 'scoped memory for tpu_custom_call.1']
    #allocation5 [shape = 'u8[196608]{0}', space=vmem, size = 0x30000, scoped, tag = 'input window, operand 1, single buffered']
    #allocation6 [shape = 's32[1]{0}', space=sflag, size = 0x4, scoped, tag = 'scoped memory for tpu_custom_call.1']
    #allocation7 [shape = 'u8[1536]{0}', space=vmem, size = 0x800, scoped, tag = 'input window, operand 2, single buffered']
    #allocation8 [shape = 'u8[8192]{0}', space=vmem, size = 0x2000, scoped, tag = 'output window, operand 0']
    %8 = vsyncpa [#allocation3], 0
    %s9 = scalar_lea.sflag [#allocation3], 1
    %10 = vsyncpa %s9, 0
    %11 = vsyncpa [#allocation6], 0
    %12 = vsyncpa [#allocation4], 0
    %s13 = scalar_lea.sflag [#allocation4], 1
    %14 = vsyncpa %s13, 0
    loop: start=0, step=1, limit=4
    $region2: #{tpu_custom_call.1} parent=1 // loop_pre_header
      _
    $region3: #{tpu_custom_call.1} parent=1 // loop_header
      %s16 = sphi 0, %s20
      %p17 = scmp.ge.s32.totalorder %s16, 4
      %s26 = sphi 0, %s28
      %s29 = sphi 0, %s26
      %s30 = sphi 0, %s29
      %s46 = sphi 0, %s30
      %s50 = sphi 0, %s50
      %s52 = sphi 0, %s50
      %s53 = sphi 0, %s52
      %s67 = sphi 0, %s53
      %s71 = sphi 0, %s71
      %s73 = sphi 0, %s71
      %s74 = sphi 0, %s73
      %s88 = sphi 0, %s74
      %s94 = sphi 0, %s96
      %s97 = sphi 0, %s94
      %s98 = sphi 0, %s97
      %s114 = sphi 0, %s98
    $region4: #{tpu_custom_call.1} parent=1 // loop_header_branch
      %19 = sbr.rel (%p17) target = $region8
    $region5: #{tpu_custom_call.1} parent=1 // loop_body
      %s21 = ssub.s32 %s16, 1
      %s22 = ssub.s32 %s16, 2
      %s23 = sadd.s32 %s16, 1
      %s24 = ssub.s32 %s16, %s23
      %p25 = scmp.eq.s32.totalorder %s24, 0
      %s27 = sadd.s32 %s26, 1
      %s28 = scalar_select %p25, %s26, %s27
      %p31 = pneg %p25
      %p32 = scmp.eq.s32.totalorder %s16, 1
      %p33 = por %p31, %p32
      %p34 = scmp.ne.s32.totalorder %s26, %s29
      %p35 = scmp.eq.s32.totalorder %s16, 0
      %p36 = por %p34, %p35
      %p37 = scmp.ne.s32.totalorder %s26, %s29
      %p38 = scmp.eq.s32.totalorder %s21, 1
      %p39 = por %p37, %p38
      %p40 = scmp.ne.s32.totalorder %s29, %s30
      %p41 = scmp.eq.s32.totalorder %s21, 0
      %p42 = por %p40, %p41
      %p43 = scmp.ne.s32.totalorder %s29, %s30
      %p44 = scmp.eq.s32.totalorder %s22, 1
      %p45 = por %p43, %p44
      %p47 = scmp.ne.s32.totalorder %s30, %s46
      %p48 = scmp.eq.s32.totalorder %s22, 0
      %p49 = por %p47, %p48
      %s51 = sadd.s32 %s50, 1
      %p54 = scmp.eq.s32.totalorder %s16, 1
      %p55 = scmp.ne.s32.totalorder %s50, %s52
      %p56 = scmp.eq.s32.totalorder %s16, 0
      %p57 = por %p55, %p56
      %p58 = scmp.ne.s32.totalorder %s50, %s52
      %p59 = scmp.eq.s32.totalorder %s21, 1
      %p60 = por %p58, %p59
      %p61 = scmp.ne.s32.totalorder %s52, %s53
      %p62 = scmp.eq.s32.totalorder %s21, 0
      %p63 = por %p61, %p62
      %p64 = scmp.ne.s32.totalorder %s52, %s53
      %p65 = scmp.eq.s32.totalorder %s22, 1
      %p66 = por %p64, %p65
      %p68 = scmp.ne.s32.totalorder %s53, %s67
      %p69 = scmp.eq.s32.totalorder %s22, 0
      %p70 = por %p68, %p69
      %s72 = sadd.s32 %s71, 1
      %p75 = scmp.eq.s32.totalorder %s16, 1
      %p76 = scmp.ne.s32.totalorder %s71, %s73
      %p77 = scmp.eq.s32.totalorder %s16, 0
      %p78 = por %p76, %p77
      %p79 = scmp.ne.s32.totalorder %s71, %s73
      %p80 = scmp.eq.s32.totalorder %s21, 1
      %p81 = por %p79, %p80
      %p82 = scmp.ne.s32.totalorder %s73, %s74
      %p83 = scmp.eq.s32.totalorder %s21, 0
      %p84 = por %p82, %p83
      %p85 = scmp.ne.s32.totalorder %s73, %s74
      %p86 = scmp.eq.s32.totalorder %s22, 1
      %p87 = por %p85, %p86
      %p89 = scmp.ne.s32.totalorder %s74, %s88
      %p90 = scmp.eq.s32.totalorder %s22, 0
      %p91 = por %p89, %p90
      %s92 = ssub.s32 %s16, %s23
      %p93 = scmp.eq.s32.totalorder %s92, 0
      %s95 = sadd.s32 %s94, 1
      %s96 = scalar_select %p93, %s94, %s95
      %p99 = pneg %p93
      %p100 = scmp.eq.s32.totalorder %s16, 1
      %p101 = por %p99, %p100
      %p102 = scmp.ne.s32.totalorder %s94, %s97
      %p103 = scmp.eq.s32.totalorder %s16, 0
      %p104 = por %p102, %p103
      %p105 = scmp.ne.s32.totalorder %s94, %s97
      %p106 = scmp.eq.s32.totalorder %s21, 1
      %p107 = por %p105, %p106
      %p108 = scmp.ne.s32.totalorder %s97, %s98
      %p109 = scmp.eq.s32.totalorder %s21, 0
      %p110 = por %p108, %p109
      %p111 = scmp.ne.s32.totalorder %s97, %s98
      %p112 = scmp.eq.s32.totalorder %s22, 1
      %p113 = por %p111, %p112
      %p115 = scmp.ne.s32.totalorder %s98, %s114
      %p116 = scmp.eq.s32.totalorder %s22, 0
      %p117 = por %p115, %p116
      %p118 = scmp.le.s32.totalorder 1, %s16
      %p119 = scmp.lt.s32.totalorder %s16, 3
      %p120 = pnand %p118, %p119
      %p121 = pneg %p120
      // Predicated region
      $region9: #{tpu_custom_call.1} parent=5 // pred_check
        _
      $region10: #{tpu_custom_call.1} parent=5 // pred_check_branch
        %123 = sbr.rel (%p120) target = $region12
      $region11: #{tpu_custom_call.1} parent=5 // pred_region
        %s124 = ssub.s32 %s16, 1
        // Predicated region
        $region13: #{tpu_custom_call.1} parent=11 // pred_check
          %p125 = pneg %p63
        $region14: #{tpu_custom_call.1} parent=11 // pred_check_branch
          %127 = sbr.rel (%p125) target = $region16
        $region15: #{tpu_custom_call.1} parent=11 // pred_region
          %129 = vsyncadd [#allocation6], 0
          %s130 = sshll.u32 %s1, 4
          %s131 = int_to_ptr.hbm [resolvable:$true] %s130
          %s132 = sshll.u32 [#allocation5], 4
          %s133 = int_to_ptr.vmem [resolvable:$true] %s132
          %138 = dma.hbm_to_vmem [thread:$0]  %s131, 6144, %s133, [#allocation6], 128, 128, 8
        $region16: #{tpu_custom_call.1} parent=11 // pred_fallthru
          _
        // Predicated region
        $region17: #{tpu_custom_call.1} parent=11 // pred_check
          %p139 = pneg %p84
        $region18: #{tpu_custom_call.1} parent=11 // pred_check_branch
          %141 = sbr.rel (%p139) target = $region20
        $region19: #{tpu_custom_call.1} parent=11 // pred_region
          %143 = vsyncadd [#allocation6], 0
          %s144 = sshll.u32 %s2, 4
          %s145 = int_to_ptr.hbm [resolvable:$true] %s144
          %s146 = sshll.u32 [#allocation7], 4
          %s147 = int_to_ptr.vmem [resolvable:$true] %s146
          %152 = dma.hbm_to_vmem [thread:$0]  %s145, 48, %s147, [#allocation6], 16, 16, 1
        $region20: #{tpu_custom_call.1} parent=11 // pred_fallthru
          _
      $region12: #{tpu_custom_call.1} parent=5 // pred_fallthru
        _
      %p153 = scmp.lt.s32.totalorder %s16, 2
      // Predicated region
      $region21: #{tpu_custom_call.1} parent=5 // pred_check
        %p154 = pneg %p153
      $region22: #{tpu_custom_call.1} parent=5 // pred_check_branch
        %156 = sbr.rel (%p154) target = $region24
      $region23: #{tpu_custom_call.1} parent=5 // pred_region
        // Predicated region
        $region25: #{tpu_custom_call.1} parent=23 // pred_check
          %p157 = pneg %p36
        $region26: #{tpu_custom_call.1} parent=23 // pred_check_branch
          %159 = sbr.rel (%p157) target = $region28
        $region27: #{tpu_custom_call.1} parent=23 // pred_region
          %s160 = sand.u32 %s26, 1
          %s161 = scalar_lea.sflag [#allocation3], %s160
          %s162 = sand.u32 %s26, 1
          %s163 = smul.addr %s162, 8
          %s164 = scalar_lea.vmem [#allocation2], %s163
          %166 = vsyncadd %s161, 0
          %s167 = smul.addr %s16, 8
          %s168 = scalar_lea.hbm %s0, %s167
          %s170 = sshll.u32 %s168, 4
          %s171 = int_to_ptr.hbm [resolvable:$true] %s170
          %s172 = sshll.u32 %s164, 4
          %s173 = int_to_ptr.vmem [resolvable:$true] %s172
          %175 = dma.hbm_to_vmem [thread:$0]  %s171, 128, %s173, %s161
        $region28: #{tpu_custom_call.1} parent=23 // pred_fallthru
          _
      $region24: #{tpu_custom_call.1} parent=5 // pred_fallthru
        _
      %p176 = scmp.le.s32.totalorder 1, %s16
      %p177 = scmp.lt.s32.totalorder %s16, 3
      %p178 = pnand %p176, %p177
      %p179 = pneg %p178
      // Predicated region
      $region29: #{tpu_custom_call.1} parent=5 // pred_check
        _
      $region30: #{tpu_custom_call.1} parent=5 // pred_check_branch
        %181 = sbr.rel (%p178) target = $region32
      $region31: #{tpu_custom_call.1} parent=5 // pred_region
        %s182 = ssub.s32 %s16, 1
        %s183 = sand.u32 %s29, 1
        %s184 = scalar_lea.sflag [#allocation3], %s183
        %s185 = sand.u32 %s29, 1
        %s186 = smul.addr %s185, 8
        %s187 = scalar_lea.vmem [#allocation2], %s186
        // Predicated region
        $region33: #{tpu_custom_call.1} parent=31 // pred_check
          %p188 = pneg %p42
        $region34: #{tpu_custom_call.1} parent=31 // pred_check_branch
          %190 = sbr.rel (%p188) target = $region36
        $region35: #{tpu_custom_call.1} parent=31 // pred_region
          %192 = dma.done %s184, 128
        $region36: #{tpu_custom_call.1} parent=31 // pred_fallthru
          _
        // Predicated region
        $region37: #{tpu_custom_call.1} parent=31 // pred_check
          %p193 = pneg %p63
        $region38: #{tpu_custom_call.1} parent=31 // pred_check_branch
          %195 = sbr.rel (%p193) target = $region40
        $region39: #{tpu_custom_call.1} parent=31 // pred_region
          %197 = dma.done [#allocation6], 6144
        $region40: #{tpu_custom_call.1} parent=31 // pred_fallthru
          _
        // Predicated region
        $region41: #{tpu_custom_call.1} parent=31 // pred_check
          %p198 = pneg %p84
        $region42: #{tpu_custom_call.1} parent=31 // pred_check_branch
          %200 = sbr.rel (%p198) target = $region44
        $region43: #{tpu_custom_call.1} parent=31 // pred_region
          %202 = dma.done [#allocation6], 48
        $region44: #{tpu_custom_call.1} parent=31 // pred_fallthru
          _
        %s203 = sand.u32 %s29, 1
        %s204 = scalar_lea.sflag [#allocation3], %s203
        %s205 = sand.u32 %s29, 1
        %s206 = smul.addr %s205, 8
        %s207 = scalar_lea.vmem [#allocation2], %s206
        %p208 = pneg %p42
        %p209 = pneg %p39
        %p210 = pneg %p63
        %p211 = pneg %p60
        %p212 = pneg %p84
        %p213 = pneg %p81
        %p214 = pneg %p110
        %p215 = pneg %p107
        %s216 = sand.u32 %s97, 1
        %s217 = scalar_lea.sflag [#allocation4], %s216
        %s218 = sand.u32 %s97, 1
        %s219 = smul.addr %s218, 8
        %s220 = scalar_lea.vmem [#allocation8], %s219
        %v221 = vld [vmem:[%s187] sm:$0xff]
        %v222 = vld [vmem:[#allocation5] sm:$0xff]
        %v223 = vld [vmem:[#allocation5 + $0x8] sm:$0xff]
        %v224 = vld [vmem:[#allocation5 + $0x10] sm:$0xff]
        %v225 = vld [vmem:[#allocation5 + $0x18] sm:$0xff]
        %v226 = vld [vmem:[#allocation5 + $0x20] sm:$0xff]
        %v227 = vld [vmem:[#allocation5 + $0x28] sm:$0xff]
        %v228 = vld [vmem:[#allocation5 + $0x30] sm:$0xff]
        %v229 = vld [vmem:[#allocation5 + $0x38] sm:$0xff]
        %v230 = vld [vmem:[#allocation5 + $0x40] sm:$0xff]
        %v231 = vld [vmem:[#allocation5 + $0x48] sm:$0xff]
        %v232 = vld [vmem:[#allocation5 + $0x50] sm:$0xff]
        %v233 = vld [vmem:[#allocation5 + $0x58] sm:$0xff]
        %v234 = vld [vmem:[#allocation5 + $0x60] sm:$0xff]
        %v235 = vld [vmem:[#allocation5 + $0x68] sm:$0xff]
        %v236 = vld [vmem:[#allocation5 + $0x70] sm:$0xff]
        %v237 = vld [vmem:[#allocation5 + $0x78] sm:$0xff]
        %v238 = vld [vmem:[#allocation7] sm:$0x1]
        %v240 = vperm.slane %v238, 0
        %242 = vmatpush.msra.mxu0 %v237
        %243 = vmatpush.msra.mxu0 %v236
        %244 = vmatpush.msra.mxu0 %v235
        %245 = vmatpush.msra.mxu0 %v234
        %246 = vmatpush.msra.mxu0 %v233
        %247 = vmatpush.msra.mxu0 %v232
        %248 = vmatpush.msra.mxu0 %v231
        %249 = vmatpush.msra.mxu0 %v230
        %250 = vmatpush.msra.mxu0 %v229
        %251 = vmatpush.msra.mxu0 %v228
        %252 = vmatpush.msra.mxu0 %v227
        %253 = vmatpush.msra.mxu0 %v226
        %254 = vmatpush.msra.mxu0 %v225
        %255 = vmatpush.msra.mxu0 %v224
        %256 = vmatpush.msra.mxu0 %v223
        %257 = vmatpush.msra.mxu0 %v222
        %258 = vmatmul.f32.gmra.mxu0 %v221
        %v259 = vpop.f32.mrf.mxu0
        %v260 = vadd.f32 %v240, %v259
        %261 = vdwg.mxu0
        %v262 = vmax.f32 %v260, 0.0
        %s263 = scalar_lea.vmem [#allocation5], 128
        %v264 = vld [vmem:[%s263] sm:$0xff]
        %v265 = vld [vmem:[%s263 + $0x8] sm:$0xff]
        %v266 = vld [vmem:[%s263 + $0x10] sm:$0xff]
        %v267 = vld [vmem:[%s263 + $0x18] sm:$0xff]
        %v268 = vld [vmem:[%s263 + $0x20] sm:$0xff]
        %v269 = vld [vmem:[%s263 + $0x28] sm:$0xff]
        %v270 = vld [vmem:[%s263 + $0x30] sm:$0xff]
        %v271 = vld [vmem:[%s263 + $0x38] sm:$0xff]
        %v272 = vld [vmem:[%s263 + $0x40] sm:$0xff]
        %v273 = vld [vmem:[%s263 + $0x48] sm:$0xff]
        %v274 = vld [vmem:[%s263 + $0x50] sm:$0xff]
        %v275 = vld [vmem:[%s263 + $0x58] sm:$0xff]
        %v276 = vld [vmem:[%s263 + $0x60] sm:$0xff]
        %v277 = vld [vmem:[%s263 + $0x68] sm:$0xff]
        %v278 = vld [vmem:[%s263 + $0x70] sm:$0xff]
        %v279 = vld [vmem:[%s263 + $0x78] sm:$0xff]
        %s280 = scalar_lea.vmem [#allocation7], 1
        %v281 = vld [vmem:[%s280] sm:$0x1]
        %v283 = vperm.slane %v281, 0
        %285 = vmatpush.msra.mxu0 %v279
        %286 = vmatpush.msra.mxu0 %v278
        %287 = vmatpush.msra.mxu0 %v277
        %288 = vmatpush.msra.mxu0 %v276
        %289 = vmatpush.msra.mxu0 %v275
        %290 = vmatpush.msra.mxu0 %v274
        %291 = vmatpush.msra.mxu0 %v273
        %292 = vmatpush.msra.mxu0 %v272
        %293 = vmatpush.msra.mxu0 %v271
        %294 = vmatpush.msra.mxu0 %v270
        %295 = vmatpush.msra.mxu0 %v269
        %296 = vmatpush.msra.mxu0 %v268
        %297 = vmatpush.msra.mxu0 %v267
        %298 = vmatpush.msra.mxu0 %v266
        %299 = vmatpush.msra.mxu0 %v265
        %300 = vmatpush.msra.mxu0 %v264
        %301 = vmatmul.f32.gmra.mxu0 %v262
        %v302 = vpop.f32.mrf.mxu0
        %v303 = vadd.f32 %v283, %v302
        %304 = vdwg.mxu0
        %v305 = vmax.f32 %v303, 0.0
        %s306 = scalar_lea.vmem [#allocation5], 256
        %v307 = vld [vmem:[%s306] sm:$0xff]
        %v308 = vld [vmem:[%s306 + $0x8] sm:$0xff]
        %v309 = vld [vmem:[%s306 + $0x10] sm:$0xff]
        %v310 = vld [vmem:[%s306 + $0x18] sm:$0xff]
        %v311 = vld [vmem:[%s306 + $0x20] sm:$0xff]
        %v312 = vld [vmem:[%s306 + $0x28] sm:$0xff]
        %v313 = vld [vmem:[%s306 + $0x30] sm:$0xff]
        %v314 = vld [vmem:[%s306 + $0x38] sm:$0xff]
        %v315 = vld [vmem:[%s306 + $0x40] sm:$0xff]
        %v316 = vld [vmem:[%s306 + $0x48] sm:$0xff]
        %v317 = vld [vmem:[%s306 + $0x50] sm:$0xff]
        %v318 = vld [vmem:[%s306 + $0x58] sm:$0xff]
        %v319 = vld [vmem:[%s306 + $0x60] sm:$0xff]
        %v320 = vld [vmem:[%s306 + $0x68] sm:$0xff]
        %v321 = vld [vmem:[%s306 + $0x70] sm:$0xff]
        %v322 = vld [vmem:[%s306 + $0x78] sm:$0xff]
        %s323 = scalar_lea.vmem [#allocation7], 2
        %v324 = vld [vmem:[%s323] sm:$0x1]
        %v326 = vperm.slane %v324, 0
        %328 = vmatpush.msra.mxu0 %v322
        %329 = vmatpush.msra.mxu0 %v321
        %330 = vmatpush.msra.mxu0 %v320
        %331 = vmatpush.msra.mxu0 %v319
        %332 = vmatpush.msra.mxu0 %v318
        %333 = vmatpush.msra.mxu0 %v317
        %334 = vmatpush.msra.mxu0 %v316
        %335 = vmatpush.msra.mxu0 %v315
        %336 = vmatpush.msra.mxu0 %v314
        %337 = vmatpush.msra.mxu0 %v313
        %338 = vmatpush.msra.mxu0 %v312
        %339 = vmatpush.msra.mxu0 %v311
        %340 = vmatpush.msra.mxu0 %v310
        %341 = vmatpush.msra.mxu0 %v309
        %342 = vmatpush.msra.mxu0 %v308
        %343 = vmatpush.msra.mxu0 %v307
        %344 = vmatmul.f32.gmra.mxu0 %v305
        %v345 = vpop.f32.mrf.mxu0
        %v346 = vadd.f32 %v326, %v345
        %347 = vdwg.mxu0
        %348 = vst [vmem:[%s220] sm:$0xff] %v346
        %s349 = sand.u32 %s97, 1
        %s350 = scalar_lea.sflag [#allocation4], %s349
        %s351 = sand.u32 %s97, 1
        %s352 = smul.addr %s351, 8
        %s353 = scalar_lea.vmem [#allocation8], %s352
        // Predicated region
        $region45: #{tpu_custom_call.1} parent=31 // pred_check
          %p354 = pneg %p107
        $region46: #{tpu_custom_call.1} parent=31 // pred_check_branch
          %356 = sbr.rel (%p354) target = $region48
        $region47: #{tpu_custom_call.1} parent=31 // pred_region
          %358 = vsyncadd %s350, 0
          %s359 = smul.addr %s21, 8
          %s360 = scalar_lea.hbm %s3, %s359
          %s362 = sshll.u32 %s353, 4
          %s363 = int_to_ptr.vmem [resolvable:$true] %s362
          %s364 = sshll.u32 %s360, 4
          %s365 = int_to_ptr.hbm [resolvable:$true] %s364
          %367 = dma.vmem_to_hbm [thread:$0]  %s363, 128, %s365, %s350
        $region48: #{tpu_custom_call.1} parent=31 // pred_fallthru
          _
      $region32: #{tpu_custom_call.1} parent=5 // pred_fallthru
        _
      %p368 = scmp.le.s32.totalorder 2, %s16
      // Predicated region
      $region49: #{tpu_custom_call.1} parent=5 // pred_check
        %p369 = pneg %p368
      $region50: #{tpu_custom_call.1} parent=5 // pred_check_branch
        %371 = sbr.rel (%p369) target = $region52
      $region51: #{tpu_custom_call.1} parent=5 // pred_region
        %s372 = ssub.s32 %s16, 2
        // Predicated region
        $region53: #{tpu_custom_call.1} parent=51 // pred_check
          %p373 = pneg %p113
        $region54: #{tpu_custom_call.1} parent=51 // pred_check_branch
          %375 = sbr.rel (%p373) target = $region56
        $region55: #{tpu_custom_call.1} parent=51 // pred_region
          %s376 = sand.u32 %s98, 1
          %s377 = scalar_lea.sflag [#allocation4], %s376
          %s378 = sand.u32 %s98, 1
          %s379 = smul.addr %s378, 8
          %s380 = scalar_lea.vmem [#allocation8], %s379
          %382 = dma.done %s377, 128
        $region56: #{tpu_custom_call.1} parent=51 // pred_fallthru
          _
      $region52: #{tpu_custom_call.1} parent=5 // pred_fallthru
        _
    $region6: #{tpu_custom_call.1} parent=1 // loop_footer
      %s20 = sadd.s32 1, %s16
    $region7: #{tpu_custom_call.1} parent=1 // loop_footer_branch
      %15 = sbr.rel target = $region3
    $region8: #{tpu_custom_call.1} parent=1 // loop_exit
      _
    %383 = vsyncpa [#allocation3], 1
    %s384 = scalar_lea.sflag [#allocation3], 1
    %385 = vsyncpa %s384, 1
    %386 = vsyncpa [#allocation6], 1
    %387 = vsyncpa [#allocation4], 1
    %s388 = scalar_lea.sflag [#allocation4], 1
    %389 = vsyncpa %s388, 1

// kernel: tpu_custom_call.1
$region0: #{tpu_custom_call.1}
  #allocation0 [shape = 'u32[]', space=smem, size = 0x4, offset = 0x4, fixed_abs, tag = 'smem constant byte address 0x4 - core index']
  #allocation1 [shape = 'u32[72,128]{1,0:T(1,128)}', space=vmem, size = 0x9000, scoped, tag = 'internal scratch']
  %s0 = inlined_call_operand.hbm [shape: f32[16,128], index: 0, kind: input, shape index: {}]
  %s1 = inlined_call_operand.hbm [shape: f32[3,128,128], index: 1, kind: input, shape index: {}]
  %s2 = inlined_call_operand.hbm [shape: f32[3,1,128], index: 2, kind: input, shape index: {}]
  %s3 = inlined_call_operand.hbm [shape: f32[16,128], index: 3, kind: output, shape index: {}]
  %s4 = sld [smem:[#allocation0]]
  $region57: #{tpu_custom_call.1} parent=0
    _
  %s6 = ssub.s32 1, %s4
  %s7 = scalar_select 0, %s6, %s4
  $region1: #{tpu_custom_call.1} parent=0
    #allocation2 [shape = 'u8[8192]{0}', space=vmem, size = 0x2000, scoped, tag = 'input window, operand 0']
    #allocation3 [shape = 's32[2]{0}', space=sflag, size = 0x8, scoped, tag = 'scoped memory for tpu_custom_call.1']
    #allocation4 [shape = 's32[2]{0}', space=sflag, size = 0x8, scoped, tag = 'scoped memory for tpu_custom_call.1']
    #allocation5 [shape = 'u8[196608]{0}', space=vmem, size = 0x30000, scoped, tag = 'input window, operand 1, single buffered']
    #allocation6 [shape = 's32[1]{0}', space=sflag, size = 0x4, scoped, tag = 'scoped memory for tpu_custom_call.1']
    #allocation7 [shape = 'u8[1536]{0}', space=vmem, size = 0x800, scoped, tag = 'input window, operand 2, single buffered']
    #allocation8 [shape = 'u8[8192]{0}', space=vmem, size = 0x2000, scoped, tag = 'output window, operand 0']
    %8 = vsyncpa [#allocation3], 0
    %s9 = scalar_lea.sflag [#allocation3], 1
    %10 = vsyncpa %s9, 0
    %11 = vsyncpa [#allocation6], 0
    %12 = vsyncpa [#allocation4], 0
    %s13 = scalar_lea.sflag [#allocation4], 1
    %14 = vsyncpa %s13, 0
    loop: start=0, step=1, limit=4
    $region2: #{tpu_custom_call.1} parent=1 // loop_pre_header
      _
    $region3: #{tpu_custom_call.1} parent=1 // loop_header
      %s16 = sphi 0, %s20
      %p17 = scmp.ge.s32.totalorder %s16, 4
      %s26 = sphi 0, %s28
      %s29 = sphi 0, %s26
      %s30 = sphi 0, %s29
      %s46 = sphi 0, %s30
      %s50 = sphi 0, %s50
      %s52 = sphi 0, %s50
      %s53 = sphi 0, %s52
      %s67 = sphi 0, %s53
      %s71 = sphi 0, %s71
      %s73 = sphi 0, %s71
      %s74 = sphi 0, %s73
      %s88 = sphi 0, %s74
      %s94 = sphi 0, %s96
      %s97 = sphi 0, %s94
      %s98 = sphi 0, %s97
      %s114 = sphi 0, %s98
    $region4: #{tpu_custom_call.1} parent=1 // loop_header_branch
      %19 = sbr.rel (%p17) target = $region8
    $region5: #{tpu_custom_call.1} parent=1 // loop_body
      %s21 = ssub.s32 %s16, 1
      %s22 = ssub.s32 %s16, 2
      %s23 = sadd.s32 %s16, 1
      %s24 = ssub.s32 %s16, %s23
      %p25 = scmp.eq.s32.totalorder %s24, 0
      %s27 = sadd.s32 %s26, 1
      %s28 = scalar_select %p25, %s26, %s27
      %p31 = pneg %p25
      %p32 = scmp.eq.s32.totalorder %s16, 1
      %p33 = por %p31, %p32
      %p34 = scmp.ne.s32.totalorder %s26, %s29
      %p35 = scmp.eq.s32.totalorder %s16, 0
      %p36 = por %p34, %p35
      %p37 = scmp.ne.s32.totalorder %s26, %s29
      %p38 = scmp.eq.s32.totalorder %s21, 1
      %p39 = por %p37, %p38
      %p40 = scmp.ne.s32.totalorder %s29, %s30
      %p41 = scmp.eq.s32.totalorder %s21, 0
      %p42 = por %p40, %p41
      %p43 = scmp.ne.s32.totalorder %s29, %s30
      %p44 = scmp.eq.s32.totalorder %s22, 1
      %p45 = por %p43, %p44
      %p47 = scmp.ne.s32.totalorder %s30, %s46
      %p48 = scmp.eq.s32.totalorder %s22, 0
      %p49 = por %p47, %p48
      %s51 = sadd.s32 %s50, 1
      %p54 = scmp.eq.s32.totalorder %s16, 1
      %p55 = scmp.ne.s32.totalorder %s50, %s52
      %p56 = scmp.eq.s32.totalorder %s16, 0
      %p57 = por %p55, %p56
      %p58 = scmp.ne.s32.totalorder %s50, %s52
      %p59 = scmp.eq.s32.totalorder %s21, 1
      %p60 = por %p58, %p59
      %p61 = scmp.ne.s32.totalorder %s52, %s53
      %p62 = scmp.eq.s32.totalorder %s21, 0
      %p63 = por %p61, %p62
      %p64 = scmp.ne.s32.totalorder %s52, %s53
      %p65 = scmp.eq.s32.totalorder %s22, 1
      %p66 = por %p64, %p65
      %p68 = scmp.ne.s32.totalorder %s53, %s67
      %p69 = scmp.eq.s32.totalorder %s22, 0
      %p70 = por %p68, %p69
      %s72 = sadd.s32 %s71, 1
      %p75 = scmp.eq.s32.totalorder %s16, 1
      %p76 = scmp.ne.s32.totalorder %s71, %s73
      %p77 = scmp.eq.s32.totalorder %s16, 0
      %p78 = por %p76, %p77
      %p79 = scmp.ne.s32.totalorder %s71, %s73
      %p80 = scmp.eq.s32.totalorder %s21, 1
      %p81 = por %p79, %p80
      %p82 = scmp.ne.s32.totalorder %s73, %s74
      %p83 = scmp.eq.s32.totalorder %s21, 0
      %p84 = por %p82, %p83
      %p85 = scmp.ne.s32.totalorder %s73, %s74
      %p86 = scmp.eq.s32.totalorder %s22, 1
      %p87 = por %p85, %p86
      %p89 = scmp.ne.s32.totalorder %s74, %s88
      %p90 = scmp.eq.s32.totalorder %s22, 0
      %p91 = por %p89, %p90
      %s92 = ssub.s32 %s16, %s23
      %p93 = scmp.eq.s32.totalorder %s92, 0
      %s95 = sadd.s32 %s94, 1
      %s96 = scalar_select %p93, %s94, %s95
      %p99 = pneg %p93
      %p100 = scmp.eq.s32.totalorder %s16, 1
      %p101 = por %p99, %p100
      %p102 = scmp.ne.s32.totalorder %s94, %s97
      %p103 = scmp.eq.s32.totalorder %s16, 0
      %p104 = por %p102, %p103
      %p105 = scmp.ne.s32.totalorder %s94, %s97
      %p106 = scmp.eq.s32.totalorder %s21, 1
      %p107 = por %p105, %p106
      %p108 = scmp.ne.s32.totalorder %s97, %s98
      %p109 = scmp.eq.s32.totalorder %s21, 0
      %p110 = por %p108, %p109
      %p111 = scmp.ne.s32.totalorder %s97, %s98
      %p112 = scmp.eq.s32.totalorder %s22, 1
      %p113 = por %p111, %p112
      %p115 = scmp.ne.s32.totalorder %s98, %s114
      %p116 = scmp.eq.s32.totalorder %s22, 0
      %p117 = por %p115, %p116
      %p118 = scmp.le.s32.totalorder 1, %s16
      %p119 = scmp.lt.s32.totalorder %s16, 3
      %p120 = pnand %p118, %p119
      %p121 = pneg %p120
      // Predicated region
      $region9: #{tpu_custom_call.1} parent=5 // pred_check
        _
      $region10: #{tpu_custom_call.1} parent=5 // pred_check_branch
        %123 = sbr.rel (%p120) target = $region12
      $region11: #{tpu_custom_call.1} parent=5 // pred_region
        %s124 = ssub.s32 %s16, 1
        // Predicated region
        $region13: #{tpu_custom_call.1} parent=11 // pred_check
          %p125 = pneg %p63
        $region14: #{tpu_custom_call.1} parent=11 // pred_check_branch
          %127 = sbr.rel (%p125) target = $region16
        $region15: #{tpu_custom_call.1} parent=11 // pred_region
          %129 = vsyncadd [#allocation6], 0
          %s130 = sshll.u32 %s1, 4
          %s131 = int_to_ptr.hbm [resolvable:$true] %s130
          %s132 = sshll.u32 [#allocation5], 4
          %s133 = int_to_ptr.vmem [resolvable:$true] %s132
          %138 = dma.hbm_to_vmem [thread:$0]  %s131, 6144, %s133, [#allocation6], 128, 128, 8
        $region16: #{tpu_custom_call.1} parent=11 // pred_fallthru
          _
        // Predicated region
        $region17: #{tpu_custom_call.1} parent=11 // pred_check
          %p139 = pneg %p84
        $region18: #{tpu_custom_call.1} parent=11 // pred_check_branch
          %141 = sbr.rel (%p139) target = $region20
        $region19: #{tpu_custom_call.1} parent=11 // pred_region
          %143 = vsyncadd [#allocation6], 0
          %s144 = sshll.u32 %s2, 4
          %s145 = int_to_ptr.hbm [resolvable:$true] %s144
          %s146 = sshll.u32 [#allocation7], 4
          %s147 = int_to_ptr.vmem [resolvable:$true] %s146
          %152 = dma.hbm_to_vmem [thread:$0]  %s145, 48, %s147, [#allocation6], 16, 16, 1
        $region20: #{tpu_custom_call.1} parent=11 // pred_fallthru
          _
      $region12: #{tpu_custom_call.1} parent=5 // pred_fallthru
        _
      %p153 = scmp.lt.s32.totalorder %s16, 2
      // Predicated region
      $region21: #{tpu_custom_call.1} parent=5 // pred_check
        %p154 = pneg %p153
      $region22: #{tpu_custom_call.1} parent=5 // pred_check_branch
        %156 = sbr.rel (%p154) target = $region24
      $region23: #{tpu_custom_call.1} parent=5 // pred_region
        // Predicated region
        $region25: #{tpu_custom_call.1} parent=23 // pred_check
          %p157 = pneg %p36
        $region26: #{tpu_custom_call.1} parent=23 // pred_check_branch
          %159 = sbr.rel (%p157) target = $region28
        $region27: #{tpu_custom_call.1} parent=23 // pred_region
          %s160 = sand.u32 %s26, 1
          %s161 = scalar_lea.sflag [#allocation3], %s160
          %s162 = sand.u32 %s26, 1
          %s163 = smul.addr %s162, 8
          %s164 = scalar_lea.vmem [#allocation2], %s163
          %166 = vsyncadd %s161, 0
          %s167 = smul.addr %s16, 8
          %s168 = scalar_lea.hbm %s0, %s167
          %s170 = sshll.u32 %s168, 4
          %s171 = int_to_ptr.hbm [resolvable:$true] %s170
          %s172 = sshll.u32 %s164, 4
          %s173 = int_to_ptr.vmem [resolvable:$true] %s172
          %175 = dma.hbm_to_vmem [thread:$0]  %s171, 128, %s173, %s161
        $region28: #{tpu_custom_call.1} parent=23 // pred_fallthru
          _
      $region24: #{tpu_custom_call.1} parent=5 // pred_fallthru
        _
      %p176 = scmp.le.s32.totalorder 1, %s16
      %p177 = scmp.lt.s32.totalorder %s16, 3
      %p178 = pnand %p176, %p177
      %p179 = pneg %p178
      // Predicated region
      $region29: #{tpu_custom_call.1} parent=5 // pred_check
        _
      $region30: #{tpu_custom_call.1} parent=5 // pred_check_branch
        %181 = sbr.rel (%p178) target = $region32
      $region31: #{tpu_custom_call.1} parent=5 // pred_region
        %s182 = ssub.s32 %s16, 1
        %s183 = sand.u32 %s29, 1
        %s184 = scalar_lea.sflag [#allocation3], %s183
        %s185 = sand.u32 %s29, 1
        %s186 = smul.addr %s185, 8
        %s187 = scalar_lea.vmem [#allocation2], %s186
        // Predicated region
        $region33: #{tpu_custom_call.1} parent=31 // pred_check
          %p188 = pneg %p42
        $region34: #{tpu_custom_call.1} parent=31 // pred_check_branch
          %190 = sbr.rel (%p188) target = $region36
        $region35: #{tpu_custom_call.1} parent=31 // pred_region
          %192 = dma.done %s184, 128
        $region36: #{tpu_custom_call.1} parent=31 // pred_fallthru
          _
        // Predicated region
        $region37: #{tpu_custom_call.1} parent=31 // pred_check
          %p193 = pneg %p63
        $region38: #{tpu_custom_call.1} parent=31 // pred_check_branch
          %195 = sbr.rel (%p193) target = $region40
        $region39: #{tpu_custom_call.1} parent=31 // pred_region
          %197 = dma.done [#allocation6], 6144
        $region40: #{tpu_custom_call.1} parent=31 // pred_fallthru
          _
        // Predicated region
        $region41: #{tpu_custom_call.1} parent=31 // pred_check
          %p198 = pneg %p84
        $region42: #{tpu_custom_call.1} parent=31 // pred_check_branch
          %200 = sbr.rel (%p198) target = $region44
        $region43: #{tpu_custom_call.1} parent=31 // pred_region
          %202 = dma.done [#allocation6], 48
        $region44: #{tpu_custom_call.1} parent=31 // pred_fallthru
          _
        %s203 = sand.u32 %s29, 1
        %s204 = scalar_lea.sflag [#allocation3], %s203
        %s205 = sand.u32 %s29, 1
        %s206 = smul.addr %s205, 8
        %s207 = scalar_lea.vmem [#allocation2], %s206
        %p208 = pneg %p42
        %p209 = pneg %p39
        %p210 = pneg %p63
        %p211 = pneg %p60
        %p212 = pneg %p84
        %p213 = pneg %p81
        %p214 = pneg %p110
        %p215 = pneg %p107
        %s216 = sand.u32 %s97, 1
        %s217 = scalar_lea.sflag [#allocation4], %s216
        %s218 = sand.u32 %s97, 1
        %s219 = smul.addr %s218, 8
        %s220 = scalar_lea.vmem [#allocation8], %s219
        %v221 = vld [vmem:[%s187] sm:$0xff]
        %v222 = vld [vmem:[#allocation5] sm:$0xff]
        %v223 = vld [vmem:[#allocation5 + $0x8] sm:$0xff]
        %v224 = vld [vmem:[#allocation5 + $0x10] sm:$0xff]
        %v225 = vld [vmem:[#allocation5 + $0x18] sm:$0xff]
        %v226 = vld [vmem:[#allocation5 + $0x20] sm:$0xff]
        %v227 = vld [vmem:[#allocation5 + $0x28] sm:$0xff]
        %v228 = vld [vmem:[#allocation5 + $0x30] sm:$0xff]
        %v229 = vld [vmem:[#allocation5 + $0x38] sm:$0xff]
        %v230 = vld [vmem:[#allocation5 + $0x40] sm:$0xff]
        %v231 = vld [vmem:[#allocation5 + $0x48] sm:$0xff]
        %v232 = vld [vmem:[#allocation5 + $0x50] sm:$0xff]
        %v233 = vld [vmem:[#allocation5 + $0x58] sm:$0xff]
        %v234 = vld [vmem:[#allocation5 + $0x60] sm:$0xff]
        %v235 = vld [vmem:[#allocation5 + $0x68] sm:$0xff]
        %v236 = vld [vmem:[#allocation5 + $0x70] sm:$0xff]
        %v237 = vld [vmem:[#allocation5 + $0x78] sm:$0xff]
        %v238 = vld [vmem:[#allocation7] sm:$0x1]
        %v240 = vperm.slane %v238, 0
        %242 = vmatpush.msra.mxu0 %v237
        %243 = vmatpush.msra.mxu0 %v236
        %244 = vmatpush.msra.mxu0 %v235
        %245 = vmatpush.msra.mxu0 %v234
        %246 = vmatpush.msra.mxu0 %v233
        %247 = vmatpush.msra.mxu0 %v232
        %248 = vmatpush.msra.mxu0 %v231
        %249 = vmatpush.msra.mxu0 %v230
        %250 = vmatpush.msra.mxu0 %v229
        %251 = vmatpush.msra.mxu0 %v228
        %252 = vmatpush.msra.mxu0 %v227
        %253 = vmatpush.msra.mxu0 %v226
        %254 = vmatpush.msra.mxu0 %v225
        %255 = vmatpush.msra.mxu0 %v224
        %256 = vmatpush.msra.mxu0 %v223
        %257 = vmatpush.msra.mxu0 %v222
        %258 = vmatmul.f32.gmra.mxu0 %v221
        %v259 = vpop.f32.mrf.mxu0
        %v260 = vadd.f32 %v240, %v259
        %261 = vdwg.mxu0
        %v262 = vmax.f32 %v260, 0.0
        %s263 = scalar_lea.vmem [#allocation5], 128
        %v264 = vld [vmem:[%s263] sm:$0xff]
        %v265 = vld [vmem:[%s263 + $0x8] sm:$0xff]
        %v266 = vld [vmem:[%s263 + $0x10] sm:$0xff]
        %v267 = vld [vmem:[%s263 + $0x18] sm:$0xff]
        %v268 = vld [vmem:[%s263 + $0x20] sm:$0xff]
        %v269 = vld [vmem:[%s263 + $0x28] sm:$0xff]
        %v270 = vld [vmem:[%s263 + $0x30] sm:$0xff]
        %v271 = vld [vmem:[%s263 + $0x38] sm:$0xff]
        %v272 = vld [vmem:[%s263 + $0x40] sm:$0xff]
        %v273 = vld [vmem:[%s263 + $0x48] sm:$0xff]
        %v274 = vld [vmem:[%s263 + $0x50] sm:$0xff]
        %v275 = vld [vmem:[%s263 + $0x58] sm:$0xff]
        %v276 = vld [vmem:[%s263 + $0x60] sm:$0xff]
        %v277 = vld [vmem:[%s263 + $0x68] sm:$0xff]
        %v278 = vld [vmem:[%s263 + $0x70] sm:$0xff]
        %v279 = vld [vmem:[%s263 + $0x78] sm:$0xff]
        %s280 = scalar_lea.vmem [#allocation7], 1
        %v281 = vld [vmem:[%s280] sm:$0x1]
        %v283 = vperm.slane %v281, 0
        %285 = vmatpush.msra.mxu0 %v279
        %286 = vmatpush.msra.mxu0 %v278
        %287 = vmatpush.msra.mxu0 %v277
        %288 = vmatpush.msra.mxu0 %v276
        %289 = vmatpush.msra.mxu0 %v275
        %290 = vmatpush.msra.mxu0 %v274
        %291 = vmatpush.msra.mxu0 %v273
        %292 = vmatpush.msra.mxu0 %v272
        %293 = vmatpush.msra.mxu0 %v271
        %294 = vmatpush.msra.mxu0 %v270
        %295 = vmatpush.msra.mxu0 %v269
        %296 = vmatpush.msra.mxu0 %v268
        %297 = vmatpush.msra.mxu0 %v267
        %298 = vmatpush.msra.mxu0 %v266
        %299 = vmatpush.msra.mxu0 %v265
        %300 = vmatpush.msra.mxu0 %v264
        %301 = vmatmul.f32.gmra.mxu0 %v262
        %v302 = vpop.f32.mrf.mxu0
        %v303 = vadd.f32 %v283, %v302
        %304 = vdwg.mxu0
        %v305 = vmax.f32 %v303, 0.0
        %s306 = scalar_lea.vmem [#allocation5], 256
        %v307 = vld [vmem:[%s306] sm:$0xff]
        %v308 = vld [vmem:[%s306 + $0x8] sm:$0xff]
        %v309 = vld [vmem:[%s306 + $0x10] sm:$0xff]
        %v310 = vld [vmem:[%s306 + $0x18] sm:$0xff]
        %v311 = vld [vmem:[%s306 + $0x20] sm:$0xff]
        %v312 = vld [vmem:[%s306 + $0x28] sm:$0xff]
        %v313 = vld [vmem:[%s306 + $0x30] sm:$0xff]
        %v314 = vld [vmem:[%s306 + $0x38] sm:$0xff]
        %v315 = vld [vmem:[%s306 + $0x40] sm:$0xff]
        %v316 = vld [vmem:[%s306 + $0x48] sm:$0xff]
        %v317 = vld [vmem:[%s306 + $0x50] sm:$0xff]
        %v318 = vld [vmem:[%s306 + $0x58] sm:$0xff]
        %v319 = vld [vmem:[%s306 + $0x60] sm:$0xff]
        %v320 = vld [vmem:[%s306 + $0x68] sm:$0xff]
        %v321 = vld [vmem:[%s306 + $0x70] sm:$0xff]
        %v322 = vld [vmem:[%s306 + $0x78] sm:$0xff]
        %s323 = scalar_lea.vmem [#allocation7], 2
        %v324 = vld [vmem:[%s323] sm:$0x1]
        %v326 = vperm.slane %v324, 0
        %328 = vmatpush.msra.mxu0 %v322
        %329 = vmatpush.msra.mxu0 %v321
        %330 = vmatpush.msra.mxu0 %v320
        %331 = vmatpush.msra.mxu0 %v319
        %332 = vmatpush.msra.mxu0 %v318
        %333 = vmatpush.msra.mxu0 %v317
        %334 = vmatpush.msra.mxu0 %v316
        %335 = vmatpush.msra.mxu0 %v315
        %336 = vmatpush.msra.mxu0 %v314
        %337 = vmatpush.msra.mxu0 %v313
        %338 = vmatpush.msra.mxu0 %v312
        %339 = vmatpush.msra.mxu0 %v311
        %340 = vmatpush.msra.mxu0 %v310
        %341 = vmatpush.msra.mxu0 %v309
        %342 = vmatpush.msra.mxu0 %v308
        %343 = vmatpush.msra.mxu0 %v307
        %344 = vmatmul.f32.gmra.mxu0 %v305
        %v345 = vpop.f32.mrf.mxu0
        %v346 = vadd.f32 %v326, %v345
        %347 = vdwg.mxu0
        %348 = vst [vmem:[%s220] sm:$0xff] %v346
        %s349 = sand.u32 %s97, 1
        %s350 = scalar_lea.sflag [#allocation4], %s349
        %s351 = sand.u32 %s97, 1
        %s352 = smul.addr %s351, 8
        %s353 = scalar_lea.vmem [#allocation8], %s352
        // Predicated region
        $region45: #{tpu_custom_call.1} parent=31 // pred_check
          %p354 = pneg %p107
        $region46: #{tpu_custom_call.1} parent=31 // pred_check_branch
          %356 = sbr.rel (%p354) target = $region48
        $region47: #{tpu_custom_call.1} parent=31 // pred_region
          %358 = vsyncadd %s350, 0
          %s359 = smul.addr %s21, 8
          %s360 = scalar_lea.hbm %s3, %s359
          %s362 = sshll.u32 %s353, 4
          %s363 = int_to_ptr.vmem [resolvable:$true] %s362
          %s364 = sshll.u32 %s360, 4
          %s365 = int_to_ptr.hbm [resolvable:$true] %s364
          %367 = dma.vmem_to_hbm [thread:$0]  %s363, 128, %s365, %s350
        $region48: #{tpu_custom_call.1} parent=31 // pred_fallthru
          _
      $region32: #{tpu_custom_call.1} parent=5 // pred_fallthru
        _
      %p368 = scmp.le.s32.totalorder 2, %s16
      // Predicated region
      $region49: #{tpu_custom_call.1} parent=5 // pred_check
        %p369 = pneg %p368
      $region50: #{tpu_custom_call.1} parent=5 // pred_check_branch
        %371 = sbr.rel (%p369) target = $region52
      $region51: #{tpu_custom_call.1} parent=5 // pred_region
        %s372 = ssub.s32 %s16, 2
        // Predicated region
        $region53: #{tpu_custom_call.1} parent=51 // pred_check
          %p373 = pneg %p113
        $region54: #{tpu_custom_call.1} parent=51 // pred_check_branch
          %375 = sbr.rel (%p373) target = $region56
        $region55: #{tpu_custom_call.1} parent=51 // pred_region
          %s376 = sand.u32 %s98, 1
          %s377 = scalar_lea.sflag [#allocation4], %s376
          %s378 = sand.u32 %s98, 1
          %s379 = smul.addr %s378, 8
          %s380 = scalar_lea.vmem [#allocation8], %s379
          %382 = dma.done %s377, 128
        $region56: #{tpu_custom_call.1} parent=51 // pred_fallthru
          _
      $region52: #{tpu_custom_call.1} parent=5 // pred_fallthru
        _
    $region6: #{tpu_custom_call.1} parent=1 // loop_footer
      %s20 = sadd.s32 1, %s16
    $region7: #{tpu_custom_call.1} parent=1 // loop_footer_branch
      %15 = sbr.rel target = $region3
    $region8: #{tpu_custom_call.1} parent=1 // loop_exit
      _
    %383 = vsyncpa [#allocation3], 1
    %s384 = scalar_lea.sflag [#allocation3], 1
    %385 = vsyncpa %s384, 1
    %386 = vsyncpa [#allocation6], 1
    %387 = vsyncpa [#allocation4], 1
    %s388 = scalar_lea.sflag [#allocation4], 1
    %389 = vsyncpa %s388, 1

</llo_original>
